<compile_context>
chip_gen: v6e
topology: v6e:2x2x1
jax: 0.10.0
libtpu: 0.0.40
codegen_flags: <defaults>
</compile_context>

<pallas_src>
import jax
import jax.numpy as jnp
from jax.experimental import pallas as pl
from jax.experimental.pallas import tpu as pltpu


# ---------------------------------------------------------------------------
# forward() materialization: one whole-array HBM->HBM DMA (no grid, no VMEM).
# ---------------------------------------------------------------------------
def _dma_copy_kernel(v_hbm_ref, o_hbm_ref, sem):
    cp = pltpu.make_async_copy(v_hbm_ref, o_hbm_ref, sem)
    cp.start()
    cp.wait()


def onnx_random_forward(value: jax.Array) -> jax.Array:
    """Materialize OnnxRandom.forward() output via a single whole-array DMA."""
    return pl.pallas_call(
        _dma_copy_kernel,
        out_shape=jax.ShapeDtypeStruct(value.shape, value.dtype),
        in_specs=[pl.BlockSpec(memory_space=pl.ANY)],
        out_specs=pl.BlockSpec(memory_space=pl.ANY),
        scratch_shapes=[pltpu.SemaphoreType.DMA(())],
    )(value)


# ---------------------------------------------------------------------------
# Optional constructor-time path: sample the RandomNormal buffer on-TPU.
# ---------------------------------------------------------------------------
_LANES = 128


def _make_normal_sample_kernel(mean: float, scale: float):
    def kernel(seed_ref, o_ref):
        pltpu.prng_seed(seed_ref[0])
        z = pltpu.stateful_normal(o_ref.shape, jnp.float32)
        o_ref[...] = (z * jnp.float32(scale) + jnp.float32(mean)).astype(o_ref.dtype)
    return kernel


def sample_random_normal_pallas(shape, dtype=jnp.float32, *, seed=0,
                                mean=0.0, scale=1.0) -> jax.Array:
    """Draw a RandomNormal(mean, scale) tensor on-TPU with the hardware PRNG."""
    total = 1
    for d in shape:
        total *= int(d)
    rows = max(8, pl.cdiv(total, _LANES))  # lane-dense (>= one (8,128) tile)
    seed_arr = jnp.asarray([seed], dtype=jnp.int32)
    flat = pl.pallas_call(
        _make_normal_sample_kernel(mean, scale),
        out_shape=jax.ShapeDtypeStruct((rows, _LANES), dtype),
        in_specs=[pl.BlockSpec(memory_space=pltpu.MemorySpace.SMEM)],
        out_specs=pl.BlockSpec(memory_space=pltpu.MemorySpace.VMEM),
    )(seed_arr)
    return flat.reshape(-1)[:total].reshape(shape)


# ---------------------------------------------------------------------------
# Module mirror
# ---------------------------------------------------------------------------
class OnnxRandomPallas:
    """Mirror of the PyTorch OnnxRandom module.

    forward() returns the stored value.  For tensor values the default (and
    fastest) path returns the buffer itself (zero traffic); pass
    materialize=True to stream it through the single-DMA Pallas kernel and get
    a freshly materialized copy.  Non-tensor values are returned as-is,
    matching the PyTorch non-tensor branch.
    """

    def __init__(self, value):
        self.value = value
        self._is_array = isinstance(value, jax.Array)

    @classmethod
    def sample(cls, shape, dtype=jnp.float32, *, seed=0, mean=0.0, scale=1.0):
        """Construct the module by sampling its RandomNormal buffer on-TPU."""
        try:
            value = jax.block_until_ready(
                sample_random_normal_pallas(shape, dtype, seed=seed,
                                            mean=mean, scale=scale))
        except Exception:
            # TODO(synk): fall back to host-side sampling if the hardware PRNG
            # primitive is unavailable in this JAX/libtpu build.
            key = jax.random.PRNGKey(seed)
            value = (jax.random.normal(key, shape, dtype=jnp.float32) * scale
                     + mean).astype(dtype)
        return cls(value)

    def forward(self, materialize: bool = False):
        if not self._is_array:
            return self.value
        if materialize:
            return onnx_random_forward(self.value)
        # Hot path: zero-FLOP identity -> return the stored buffer directly.
        return self.value

    __call__ = forward


if __name__ == "__main__":
    # Deterministic "RandomNormal" buffer sampled once at module-construction
    # time (mean=0, scale=1 -- ONNX RandomNormal defaults), mimicking the
    # onnx2torch conversion step.
    key = jax.random.PRNGKey(0)
    shape = (2, 4, 16, 128)  # small N-D shape, lane-dense last dim
    value = jax.random.normal(key, shape, dtype=jnp.float32)

    module = OnnxRandomPallas(value)

    # Fast path: forward() returns the stored buffer (no kernel, no traffic).
    out_fast = module()
    assert out_fast is value

    # Materialized path: one whole-array HBM->HBM DMA.
    out = jax.block_until_ready(module(materialize=True))
    assert out.shape == value.shape and out.dtype == value.dtype
    assert bool(jnp.all(out == value))

    # On-TPU construction path: sample the buffer with the Pallas PRNG kernel.
    sampled_module = OnnxRandomPallas.sample(shape, jnp.float32, seed=0)
    s = jax.block_until_ready(sampled_module())
    assert s.shape == shape and s.dtype == jnp.float32
    assert bool(jnp.all(jnp.isfinite(s)))

    # Non-tensor branch matches the PyTorch module.
    assert OnnxRandomPallas(3.14)() == 3.14

    print("KERNEL_OK")
</pallas_src>

<mosaic_0001>
module attributes {stable_mosaic.version = 11 : i64} {
  func.func @_dma_copy_kernel(%arg0: memref<2x4x16x128xf32, #tpu.memory_space<any>>, %arg1: memref<2x4x16x128xf32, #tpu.memory_space<any>>, %arg2: memref<!tpu.dma_semaphore, #tpu.memory_space<semaphore_mem>>) attributes {dimension_semantics = [], scalar_prefetch = 0 : i64, scratch_operands = 1 : i64, tpu.core_type = #tpu.core_type<tc>} {
    tpu.enqueue_dma source(%arg0 : memref<2x4x16x128xf32, #tpu.memory_space<any>>) target(%arg1 : memref<2x4x16x128xf32, #tpu.memory_space<any>>) target_semaphore(%arg2 : memref<!tpu.dma_semaphore, #tpu.memory_space<semaphore_mem>>)
    tpu.wait_dma2 semaphore(%arg2 : memref<!tpu.dma_semaphore, #tpu.memory_space<semaphore_mem>>) src(%arg0 : memref<2x4x16x128xf32, #tpu.memory_space<any>>) dst(%arg1 : memref<2x4x16x128xf32, #tpu.memory_space<any>>)
    return
  }
}

</mosaic_0001>

<llo_original>
// kernel: tpu_custom_call.1
$region0: #{tpu_custom_call.1}
  #allocation0 [shape = 'u32[]', space=smem, size = 0x4, offset = 0x4, fixed_abs, tag = 'smem constant byte address 0x4 - core index']
  #allocation1 [shape = 'u32[144,128]{1,0:T(1,128)}', space=vmem, size = 0x12000, scoped, tag = 'internal scratch']
  #allocation2 [shape = 's32[1]{0}', space=sflag, size = 0x4, scoped, tag = 'scratch operand']
  #allocation3 [shape = 's32[]', space=sflag, size = 0x4, offset = 0, fixed_abs, tag = 'sflag constant byte address 0x0 - dummy sync flag']
  #allocation4 [shape = 'u32[0]{0}', space=smem, size = 0, offset = 0, fixed_abs, tag = 'smem constant byte address 0x0 - null']
  %s0 = inlined_call_operand.hbm [shape: f32[2,4,16,128], index: 0, kind: input, shape index: {}]
  %s1 = inlined_call_operand.hbm [shape: f32[2,4,16,128], index: 1, kind: output, shape index: {}]
  %s2 = sld [smem:[#allocation0]]
  $region2: #{tpu_custom_call.1} parent=0
    _
  %s4 = ssub.s32 1, %s2
  %s5 = scalar_select 0, %s4, %s2
  %s7 = sshll.u32 1, 14
  %s8 = sxor.u32 4294967295, %s7
  %12 = dma.general %s0, 2048, %s1, [#allocation2], 131072, [#allocation4], 0, 0
  %s13 = smul.u32 2, 4
  %s14 = smul.u32 %s13, 16
  %s15 = smul.u32 %s14, 1
  %s16 = sshll.u32 %s15, 4
  %17 = dma.done [#allocation2], %s16
  %18 = vsyncmov [#allocation2]
  %s19 = vpop.sfrf %18
  %p20 = scmp.eq.s32.totalorder %s19, 0
  %p21 = pneg %p20
  %23 = shalt.err (%p21)

</llo_original>
